<compile_context>
chip_gen: v7x
topology: tpu7x:2x2x1
jax: 0.10.0
libtpu: 0.0.40
codegen_flags: <defaults>
</compile_context>

<pallas_src>
import functools

import jax
import jax.numpy as jnp
from jax.experimental import pallas as pl
from jax.experimental.pallas import tpu as pltpu


def _bn1d_kernel(x_ref, gamma_ref, beta_ref, rm_ref, rv_ref,
                 out_ref, new_rm_ref, new_rv_ref, *, eps, momentum):
    # One (N, TD) column slab per grid step; the per-feature reduction over N is
    # independent across D tiles, so no cross-tile state is needed.
    x = x_ref[...].astype(jnp.float32)                 # (N, TD)
    n = x.shape[0]

    mean = jnp.mean(x, axis=0, keepdims=True)          # (1, TD)
    diff = x - mean
    # torch.var default: unbiased (Bessel correction, divide by N-1), matching
    # the module.  (n == 1 yields NaN at runtime, same as torch.var.)
    var = jnp.sum(diff * diff, axis=0, keepdims=True) / jnp.float32(n - 1)

    inv_std = jax.lax.rsqrt(var + jnp.float32(eps))
    out = gamma_ref[...] * (diff * inv_std) + beta_ref[...]
    out_ref[...] = out.astype(out_ref.dtype)

    # Fused running-stat EMA (saves a separate XLA elementwise pass over D).
    m = jnp.float32(momentum)
    new_rm_ref[...] = (1.0 - m) * rm_ref[...] + m * mean
    new_rv_ref[...] = (1.0 - m) * rv_ref[...] + m * var


def _choose_tile_d(n_rows, d, itemsize):
    """Largest lane-dense (multiple-of-128) D tile that fits the VMEM budget."""
    if d % 128 != 0:
        # Small / odd feature dims (e.g. D=32): take the full extent as one block.
        return d
    budget = 24 * 1024 * 1024  # fits scoped-VMEM defaults on v5e/v6e/v7x
    # Live per grid step: 2x double-buffered x blocks + 2x out blocks + ~2 f32
    # temporaries of the slab, plus the small (1, TD) f32 params/stats.
    bytes_per_lane = n_rows * (4 * itemsize + 8) + 6 * 4
    cap = max(128, (budget // bytes_per_lane) // 128 * 128)
    cap = min(cap, 2048, d)
    # Largest multiple of 128 <= cap that divides D (avoids partial last tiles).
    for td in range(cap, 127, -128):
        if d % td == 0:
            return td
    return 128


def batchnorm1d_forward(x, gamma, beta, running_mean, running_var,
                        eps=1e-5, momentum=0.1):
    """Training-mode BatchNorm1d forward.

    x: (N, D) or (B, T, D).  Returns (out, new_running_mean, new_running_var),
    with running stats shaped (1, D) exactly as the PyTorch module produces.
    """
    orig_shape = x.shape
    if x.ndim == 3:
        x2d = x.reshape(-1, x.shape[-1])     # reduce over dims (0, 1)
    elif x.ndim == 2:
        x2d = x
    else:
        raise ValueError("BatchNorm1d expects 2-D or 3-D input")

    N, D = x2d.shape
    f32 = jnp.float32
    gamma2d = jnp.asarray(gamma, f32).reshape(1, D)
    beta2d = jnp.asarray(beta, f32).reshape(1, D)
    rm2d = jnp.asarray(running_mean, f32).reshape(1, D)
    rv2d = jnp.asarray(running_var, f32).reshape(1, D)

    td = _choose_tile_d(N, D, jnp.dtype(x2d.dtype).itemsize)
    grid = (pl.cdiv(D, td),)

    slab_spec = pl.BlockSpec((N, td), lambda j: (0, j))
    vec_spec = pl.BlockSpec((1, td), lambda j: (0, j))

    out, new_rm, new_rv = pl.pallas_call(
        functools.partial(_bn1d_kernel, eps=float(eps), momentum=float(momentum)),
        grid=grid,
        in_specs=[slab_spec, vec_spec, vec_spec, vec_spec, vec_spec],
        out_specs=(slab_spec, vec_spec, vec_spec),
        out_shape=(
            jax.ShapeDtypeStruct((N, D), x2d.dtype),
            jax.ShapeDtypeStruct((1, D), f32),
            jax.ShapeDtypeStruct((1, D), f32),
        ),
        compiler_params=pltpu.CompilerParams(
            dimension_semantics=("parallel",),      # shard D tiles across TCs (v7x)
            vmem_limit_bytes=32 * 1024 * 1024,
        ),
    )(x2d, gamma2d, beta2d, rm2d, rv2d)

    if x.ndim == 3:
        out = out.reshape(orig_shape)
    return out, new_rm, new_rv


if __name__ == "__main__":
    key = jax.random.PRNGKey(0)

    def reference(x2d, gamma, beta, rm, rv, eps=1e-5, momentum=0.1):
        n = x2d.shape[0]
        mean = jnp.mean(x2d, axis=0, keepdims=True)
        var = jnp.sum((x2d - mean) ** 2, axis=0, keepdims=True) / (n - 1)
        out = gamma * (x2d - mean) / jnp.sqrt(var + eps) + beta
        new_rm = (1.0 - momentum) * rm.reshape(1, -1) + momentum * mean
        new_rv = (1.0 - momentum) * rv.reshape(1, -1) + momentum * var
        return out, new_rm, new_rv

    # Case 1: small 2-D input (typical MLP hidden width), D < 128 -> full-extent block.
    N, D = 8, 32
    x = jax.random.normal(key, (N, D), dtype=jnp.float32)
    gamma = jnp.ones((D,), jnp.float32)
    beta = jnp.zeros((D,), jnp.float32)
    rm = jnp.zeros((D,), jnp.float32)
    rv = jnp.ones((D,), jnp.float32)
    out, nrm, nrv = batchnorm1d_forward(x, gamma, beta, rm, rv)
    jax.block_until_ready((out, nrm, nrv))
    o_r, rm_r, rv_r = reference(x, gamma, beta, rm, rv)
    assert jnp.allclose(out, o_r, atol=1e-5, rtol=1e-5), "2-D output mismatch"
    assert jnp.allclose(nrm, rm_r, atol=1e-6, rtol=1e-6), "running_mean mismatch"
    assert jnp.allclose(nrv, rv_r, atol=1e-6, rtol=1e-6), "running_var mismatch"

    # Case 2: lane-dense tiled path (D a multiple of 128 -> multi-tile D grid).
    key, k2 = jax.random.split(key)
    N2, D2 = 64, 4096
    x2 = jax.random.normal(k2, (N2, D2), dtype=jnp.float32)
    gamma2 = jnp.full((D2,), 1.5, jnp.float32)
    beta2 = jnp.full((D2,), 0.25, jnp.float32)
    rm2 = jnp.zeros((D2,), jnp.float32)
    rv2 = jnp.ones((D2,), jnp.float32)
    out2, nrm2, nrv2 = batchnorm1d_forward(x2, gamma2, beta2, rm2, rv2)
    jax.block_until_ready((out2, nrm2, nrv2))
    o2_r, rm2_r, rv2_r = reference(x2, gamma2, beta2, rm2, rv2)
    assert jnp.allclose(out2, o2_r, atol=1e-5, rtol=1e-5), "tiled output mismatch"
    assert jnp.allclose(nrm2, rm2_r, atol=1e-5, rtol=1e-5), "tiled running_mean mismatch"
    assert jnp.allclose(nrv2, rv2_r, atol=1e-5, rtol=1e-5), "tiled running_var mismatch"

    # Case 3: 3-D input (B, T, D) -> reduction over (0, 1), as in the module.
    key, k3 = jax.random.split(key)
    B, T, D3 = 2, 8, 32
    x3 = jax.random.normal(k3, (B, T, D3), dtype=jnp.float32)
    gamma3 = jnp.ones((D3,), jnp.float32)
    beta3 = jnp.zeros((D3,), jnp.float32)
    rm3 = jnp.zeros((D3,), jnp.float32)
    rv3 = jnp.ones((D3,), jnp.float32)
    out3, nrm3, nrv3 = batchnorm1d_forward(x3, gamma3, beta3, rm3, rv3)
    jax.block_until_ready((out3, nrm3, nrv3))
    o3_r, rm3_r, rv3_r = reference(x3.reshape(-1, D3), gamma3, beta3, rm3, rv3)
    assert jnp.allclose(out3.reshape(-1, D3), o3_r, atol=1e-5, rtol=1e-5), "3-D output mismatch"
    assert jnp.allclose(nrm3, rm3_r, atol=1e-6, rtol=1e-6), "3-D running_mean mismatch"
    assert jnp.allclose(nrv3, rv3_r, atol=1e-6, rtol=1e-6), "3-D running_var mismatch"

    print("KERNEL_OK")
</pallas_src>

<mosaic_0001>
module attributes {stable_mosaic.version = 11 : i64} {
  func.func @_bn1d_kernel(%arg0: i32, %arg1: memref<8x32xf32, #tpu.memory_space<vmem>>, %arg2: memref<1x32xf32, #tpu.memory_space<vmem>>, %arg3: memref<1x32xf32, #tpu.memory_space<vmem>>, %arg4: memref<1x32xf32, #tpu.memory_space<vmem>>, %arg5: memref<1x32xf32, #tpu.memory_space<vmem>>, %arg6: memref<8x32xf32, #tpu.memory_space<vmem>>, %arg7: memref<1x32xf32, #tpu.memory_space<vmem>>, %arg8: memref<1x32xf32, #tpu.memory_space<vmem>>) attributes {dimension_semantics = [#tpu.dimension_semantics<parallel>], iteration_bounds = array<i64: 1>, scalar_prefetch = 0 : i64, scratch_operands = 0 : i64, tpu.core_type = #tpu.core_type<tc>, window_params = [{transform_indices = @transform_0, window_bounds = array<i64: 8, 32>}, {transform_indices = @transform_1, window_bounds = array<i64: 1, 32>}, {transform_indices = @transform_2, window_bounds = array<i64: 1, 32>}, {transform_indices = @transform_3, window_bounds = array<i64: 1, 32>}, {transform_indices = @transform_4, window_bounds = array<i64: 1, 32>}, {transform_indices = @transform_5, window_bounds = array<i64: 8, 32>}, {transform_indices = @transform_6, window_bounds = array<i64: 1, 32>}, {transform_indices = @transform_7, window_bounds = array<i64: 1, 32>}]} {
    %c0 = arith.constant 0 : index
    %c0_0 = arith.constant 0 : index
    %0 = vector.load %arg1[%c0, %c0_0] : memref<8x32xf32, #tpu.memory_space<vmem>>, vector<8x32xf32>
    %cst = arith.constant dense<0.000000e+00> : vector<32xf32>
    %1 = vector.multi_reduction <add>, %0, %cst [0] : vector<8x32xf32> to vector<32xf32>
    %2 = vector.shape_cast %1 : vector<32xf32> to vector<1x32xf32>
    %cst_1 = arith.constant 8.000000e+00 : f32
    %3 = vector.broadcast %cst_1 : f32 to vector<1x32xf32>
    %4 = arith.divf %2, %3 : vector<1x32xf32>
    %5 = vector.broadcast %4 : vector<1x32xf32> to vector<8x32xf32>
    %6 = arith.subf %0, %5 : vector<8x32xf32>
    %7 = arith.mulf %6, %6 : vector<8x32xf32>
    %cst_2 = arith.constant dense<0.000000e+00> : vector<32xf32>
    %8 = vector.multi_reduction <add>, %7, %cst_2 [0] : vector<8x32xf32> to vector<32xf32>
    %9 = vector.shape_cast %8 : vector<32xf32> to vector<1x32xf32>
    %cst_3 = arith.constant 7.000000e+00 : f32
    %10 = vector.broadcast %cst_3 : f32 to vector<1x32xf32>
    %11 = arith.divf %9, %10 : vector<1x32xf32>
    %cst_4 = arith.constant 9.99999974E-6 : f32
    %12 = vector.broadcast %cst_4 : f32 to vector<1x32xf32>
    %13 = arith.addf %11, %12 : vector<1x32xf32>
    %14 = math.rsqrt %13 : vector<1x32xf32>
    %c0_5 = arith.constant 0 : index
    %c0_6 = arith.constant 0 : index
    %15 = vector.load %arg2[%c0_5, %c0_6] : memref<1x32xf32, #tpu.memory_space<vmem>>, vector<1x32xf32>
    %16 = vector.broadcast %14 : vector<1x32xf32> to vector<8x32xf32>
    %17 = arith.mulf %6, %16 : vector<8x32xf32>
    %18 = vector.broadcast %15 : vector<1x32xf32> to vector<8x32xf32>
    %19 = arith.mulf %18, %17 : vector<8x32xf32>
    %c0_7 = arith.constant 0 : index
    %c0_8 = arith.constant 0 : index
    %20 = vector.load %arg3[%c0_7, %c0_8] : memref<1x32xf32, #tpu.memory_space<vmem>>, vector<1x32xf32>
    %21 = vector.broadcast %20 : vector<1x32xf32> to vector<8x32xf32>
    %22 = arith.addf %19, %21 : vector<8x32xf32>
    %c0_9 = arith.constant 0 : index
    %c0_10 = arith.constant 0 : index
    %23 = vector.load %arg6[%c0_9, %c0_10] : memref<8x32xf32, #tpu.memory_space<vmem>>, vector<8x32xf32>
    tpu.vector_store %arg6[%c0_9, %c0_10], %22 {strides = array<i32>} : memref<8x32xf32, #tpu.memory_space<vmem>>, vector<8x32xf32>,
    %cst_11 = arith.constant 1.000000e+00 : f32
    %cst_12 = arith.constant 1.000000e-01 : f32
    %24 = arith.subf %cst_11, %cst_12 : f32
    %c0_13 = arith.constant 0 : index
    %c0_14 = arith.constant 0 : index
    %25 = vector.load %arg4[%c0_13, %c0_14] : memref<1x32xf32, #tpu.memory_space<vmem>>, vector<1x32xf32>
    %26 = vector.broadcast %24 : f32 to vector<1x32xf32>
    %27 = arith.mulf %26, %25 : vector<1x32xf32>
    %cst_15 = arith.constant 1.000000e-01 : f32
    %28 = vector.broadcast %cst_15 : f32 to vector<1x32xf32>
    %29 = arith.mulf %28, %4 : vector<1x32xf32>
    %30 = arith.addf %27, %29 : vector<1x32xf32>
    %c0_16 = arith.constant 0 : index
    %c0_17 = arith.constant 0 : index
    %31 = vector.load %arg7[%c0_16, %c0_17] : memref<1x32xf32, #tpu.memory_space<vmem>>, vector<1x32xf32>
    tpu.vector_store %arg7[%c0_16, %c0_17], %30 {strides = array<i32>} : memref<1x32xf32, #tpu.memory_space<vmem>>, vector<1x32xf32>,
    %cst_18 = arith.constant 1.000000e+00 : f32
    %cst_19 = arith.constant 1.000000e-01 : f32
    %32 = arith.subf %cst_18, %cst_19 : f32
    %c0_20 = arith.constant 0 : index
    %c0_21 = arith.constant 0 : index
    %33 = vector.load %arg5[%c0_20, %c0_21] : memref<1x32xf32, #tpu.memory_space<vmem>>, vector<1x32xf32>
    %34 = vector.broadcast %32 : f32 to vector<1x32xf32>
    %35 = arith.mulf %34, %33 : vector<1x32xf32>
    %cst_22 = arith.constant 1.000000e-01 : f32
    %36 = vector.broadcast %cst_22 : f32 to vector<1x32xf32>
    %37 = arith.mulf %36, %11 : vector<1x32xf32>
    %38 = arith.addf %35, %37 : vector<1x32xf32>
    %c0_23 = arith.constant 0 : index
    %c0_24 = arith.constant 0 : index
    %39 = vector.load %arg8[%c0_23, %c0_24] : memref<1x32xf32, #tpu.memory_space<vmem>>, vector<1x32xf32>
    tpu.vector_store %arg8[%c0_23, %c0_24], %38 {strides = array<i32>} : memref<1x32xf32, #tpu.memory_space<vmem>>, vector<1x32xf32>,
    return
  }
  func.func @transform_0(%arg0: i32) -> (i32, i32) {
    %c0_i32 = arith.constant 0 : i32
    %c0_i32_0 = arith.constant 0 : i32
    return %c0_i32, %arg0 : i32, i32
  }
  func.func @transform_1(%arg0: i32) -> (i32, i32) {
    %c0_i32 = arith.constant 0 : i32
    %c0_i32_0 = arith.constant 0 : i32
    return %c0_i32, %arg0 : i32, i32
  }
  func.func @transform_2(%arg0: i32) -> (i32, i32) {
    %c0_i32 = arith.constant 0 : i32
    %c0_i32_0 = arith.constant 0 : i32
    return %c0_i32, %arg0 : i32, i32
  }
  func.func @transform_3(%arg0: i32) -> (i32, i32) {
    %c0_i32 = arith.constant 0 : i32
    %c0_i32_0 = arith.constant 0 : i32
    return %c0_i32, %arg0 : i32, i32
  }
  func.func @transform_4(%arg0: i32) -> (i32, i32) {
    %c0_i32 = arith.constant 0 : i32
    %c0_i32_0 = arith.constant 0 : i32
    return %c0_i32, %arg0 : i32, i32
  }
  func.func @transform_5(%arg0: i32) -> (i32, i32) {
    %c0_i32 = arith.constant 0 : i32
    %c0_i32_0 = arith.constant 0 : i32
    return %c0_i32, %arg0 : i32, i32
  }
  func.func @transform_6(%arg0: i32) -> (i32, i32) {
    %c0_i32 = arith.constant 0 : i32
    %c0_i32_0 = arith.constant 0 : i32
    return %c0_i32, %arg0 : i32, i32
  }
  func.func @transform_7(%arg0: i32) -> (i32, i32) {
    %c0_i32 = arith.constant 0 : i32
    %c0_i32_0 = arith.constant 0 : i32
    return %c0_i32, %arg0 : i32, i32
  }
}

</mosaic_0001>

<llo_original>
// kernel: tpu_custom_call.1
$region0: #{tpu_custom_call.1}
  #allocation0 [shape = 'u32[]', space=smem, size = 0x4, offset = 0x4, fixed_abs, tag = 'smem constant byte address 0x4 - core index']
  #allocation1 [shape = 'u32[144,128]{1,0:T(1,128)}', space=vmem, size = 0x12000, scoped, tag = 'internal scratch']
  %s0 = inlined_call_operand.hbm [shape: f32[8,32], index: 0, kind: input, shape index: {}]
  %s1 = inlined_call_operand.vmem [shape: f32[1,32], index: 1, kind: input, shape index: {}]
  %s2 = inlined_call_operand.vmem [shape: f32[1,32], index: 2, kind: input, shape index: {}]
  %s3 = inlined_call_operand.vmem [shape: f32[1,32], index: 3, kind: input, shape index: {}]
  %s4 = inlined_call_operand.vmem [shape: f32[1,32], index: 4, kind: input, shape index: {}]
  %s5 = inlined_call_operand.hbm [shape: f32[8,32], index: 5, kind: output, shape index: {0}]
  %s6 = inlined_call_operand.hbm [shape: f32[1,32], index: 6, kind: output, shape index: {1}]
  %s7 = inlined_call_operand.hbm [shape: f32[1,32], index: 7, kind: output, shape index: {2}]
  %8 = xla_tuple %s5, %s6, %s7
  %s9 = sld [smem:[#allocation0]]
  $region50: #{tpu_custom_call.1} parent=0
    _
  %s11 = ssub.s32 1, %s9
  %s12 = scalar_select 0, %s11, %s9
  $region1: #{tpu_custom_call.1} parent=0
    #allocation2 [shape = 'u8[4096]{0}', space=vmem, size = 0x1000, scoped, tag = 'input window, operand 0, single buffered']
    #allocation3 [shape = 's32[1]{0}', space=sflag, size = 0x4, scoped, tag = 'scoped memory for tpu_custom_call.1']
    #allocation4 [shape = 's32[1]{0}', space=sflag, size = 0x4, scoped, tag = 'scoped memory for tpu_custom_call.1']
    #allocation5 [shape = 'u8[4096]{0}', space=vmem, size = 0x1000, scoped, tag = 'output window, operand 0, single buffered']
    #allocation6 [shape = 'u8[512]{0}', space=vmem, size = 0x400, scoped, tag = 'output window, operand 1, single buffered']
    #allocation7 [shape = 's32[1]{0}', space=sflag, size = 0x4, scoped, tag = 'scoped memory for tpu_custom_call.1']
    #allocation8 [shape = 'u8[512]{0}', space=vmem, size = 0x400, scoped, tag = 'output window, operand 2, single buffered']
    %13 = vsyncpa [#allocation3], 0
    %14 = vsyncpa [#allocation4], 0
    %15 = vsyncpa [#allocation7], 0
    // Predicated region
    $region2: #{tpu_custom_call.1} parent=1 // pred_check
      _
    $region3: #{tpu_custom_call.1} parent=1 // pred_check_branch
      %17 = sbr.rel (0) target = $region5
    $region4: #{tpu_custom_call.1} parent=1 // pred_region
      %s19 = ssub.s32 128, 128
      %20 = vsyncadd [#allocation3], %s19
      %s22 = sshll.u32 [#allocation2], 4
      %s23 = int_to_ptr.vmem [resolvable:$true] %s22
      %25 = dma.hbm_to_vmem [thread:$0]  %s0, 128, %s23, [#allocation3]
    $region5: #{tpu_custom_call.1} parent=1 // pred_fallthru
      _
    // Predicated region
    $region6: #{tpu_custom_call.1} parent=1 // pred_check
      _
    $region7: #{tpu_custom_call.1} parent=1 // pred_check_branch
      %27 = sbr.rel (0) target = $region9
    $region8: #{tpu_custom_call.1} parent=1 // pred_region
      _
    $region9: #{tpu_custom_call.1} parent=1 // pred_fallthru
      _
    // Predicated region
    $region10: #{tpu_custom_call.1} parent=1 // pred_check
      _
    $region11: #{tpu_custom_call.1} parent=1 // pred_check_branch
      %29 = sbr.rel (0) target = $region13
    $region12: #{tpu_custom_call.1} parent=1 // pred_region
      _
    $region13: #{tpu_custom_call.1} parent=1 // pred_fallthru
      _
    // Predicated region
    $region14: #{tpu_custom_call.1} parent=1 // pred_check
      _
    $region15: #{tpu_custom_call.1} parent=1 // pred_check_branch
      %31 = sbr.rel (0) target = $region17
    $region16: #{tpu_custom_call.1} parent=1 // pred_region
      _
    $region17: #{tpu_custom_call.1} parent=1 // pred_fallthru
      _
    // Predicated region
    $region18: #{tpu_custom_call.1} parent=1 // pred_check
      _
    $region19: #{tpu_custom_call.1} parent=1 // pred_check_branch
      %33 = sbr.rel (0) target = $region21
    $region20: #{tpu_custom_call.1} parent=1 // pred_region
      _
    $region21: #{tpu_custom_call.1} parent=1 // pred_fallthru
      _
    // Predicated region
    $region22: #{tpu_custom_call.1} parent=1 // pred_check
      _
    $region23: #{tpu_custom_call.1} parent=1 // pred_check_branch
      %35 = sbr.rel (0) target = $region25
    $region24: #{tpu_custom_call.1} parent=1 // pred_region
      %36 = dma.done [#allocation3], 128
    $region25: #{tpu_custom_call.1} parent=1 // pred_fallthru
      _
    %v37 = vld [vmem:[#allocation2] sm:$0xff]
    %vm38 = vcmask 261120
    %v39 = vsel %vm38, %v37, 0.0
    %v40 = vrot.slane %v39, 4
    %v41 = vadd.f32 %v39, %v40
    %v42 = vrot.slane %v41, 2
    %v43 = vadd.f32 %v41, %v42
    %v44 = vrot.slane %v43, 1
    %v45 = vadd.f32 %v43, %v44
    %v46 = vrcp.pop 8.0
    %v47 = vmul.f32 %v45, %v46
    %v48 = vsub.f32 %v37, %v47
    %v49 = vmul.f32 %v48, %v48
    %v50 = vsel %vm38, %v49, 0.0
    %v51 = vrot.slane %v50, 4
    %v52 = vadd.f32 %v50, %v51
    %v53 = vrot.slane %v52, 2
    %v54 = vadd.f32 %v52, %v53
    %v55 = vrot.slane %v54, 1
    %v56 = vadd.f32 %v54, %v55
    %v57 = vrcp.pop 7.0
    %v58 = vmul.f32 %v56, %v57
    %v59 = vadd.f32 %v58, 1e-05
    %v60 = vrsqrt.pop %v59
    %v61 = vld [vmem:[%s1] sm:$0x1]
    %v62 = vmul.f32 %v48, %v60
    %v64 = vlaneseq
    %v65 = vshrl.u32 %v64, 7
    %v66 = vsub.s32 0, %v65
    %v67 = vrot.slane %v61, %v66
    %v69 = vmul.f32 %v67, %v62
    %v70 = vld [vmem:[%s2] sm:$0x1]
    %v72 = vlaneseq
    %v73 = vshrl.u32 %v72, 7
    %v74 = vsub.s32 0, %v73
    %v75 = vrot.slane %v70, %v74
    %v77 = vadd.f32 %v69, %v75
    %78 = vst.msk [vmem:[#allocation5] sm:$0xff] %vm38, %v77
    %v79 = vld [vmem:[%s3] sm:$0x1]
    %v80 = vmul.f32 %v79, 0.9
    %v81 = vmul.f32 %v47, 0.1
    %v82 = vadd.f32 %v80, %v81
    %vm83 = vcmask 253952
    %84 = vst.msk [vmem:[#allocation6] sm:$0x1] %vm83, %v82
    %v85 = vld [vmem:[%s4] sm:$0x1]
    %v86 = vmul.f32 %v85, 0.9
    %v87 = vmul.f32 %v58, 0.1
    %v88 = vadd.f32 %v86, %v87
    %89 = vst.msk [vmem:[#allocation8] sm:$0x1] %vm83, %v88
    // Predicated region
    $region26: #{tpu_custom_call.1} parent=1 // pred_check
      _
    $region27: #{tpu_custom_call.1} parent=1 // pred_check_branch
      %91 = sbr.rel (0) target = $region29
    $region28: #{tpu_custom_call.1} parent=1 // pred_region
      %s93 = ssub.s32 128, 128
      %94 = vsyncadd [#allocation4], %s93
      %s96 = sshll.u32 [#allocation5], 4
      %s97 = int_to_ptr.vmem [resolvable:$true] %s96
      %99 = dma.vmem_to_hbm [thread:$0]  %s97, 128, %s5, [#allocation4]
    $region29: #{tpu_custom_call.1} parent=1 // pred_fallthru
      _
    // Predicated region
    $region30: #{tpu_custom_call.1} parent=1 // pred_check
      _
    $region31: #{tpu_custom_call.1} parent=1 // pred_check_branch
      %101 = sbr.rel (0) target = $region33
    $region32: #{tpu_custom_call.1} parent=1 // pred_region
      %s103 = ssub.s32 16, 16
      %104 = vsyncadd [#allocation7], %s103
      %s106 = sshll.u32 [#allocation6], 4
      %s107 = int_to_ptr.vmem [resolvable:$true] %s106
      %109 = dma.vmem_to_hbm [thread:$0]  %s107, 16, %s6, [#allocation7]
    $region33: #{tpu_custom_call.1} parent=1 // pred_fallthru
      _
    // Predicated region
    $region34: #{tpu_custom_call.1} parent=1 // pred_check
      _
    $region35: #{tpu_custom_call.1} parent=1 // pred_check_branch
      %111 = sbr.rel (0) target = $region37
    $region36: #{tpu_custom_call.1} parent=1 // pred_region
      %s113 = ssub.s32 16, 16
      %114 = vsyncadd [#allocation7], %s113
      %s116 = sshll.u32 [#allocation8], 4
      %s117 = int_to_ptr.vmem [resolvable:$true] %s116
      %119 = dma.vmem_to_hbm [thread:$0]  %s117, 16, %s7, [#allocation7]
    $region37: #{tpu_custom_call.1} parent=1 // pred_fallthru
      _
    // Predicated region
    $region38: #{tpu_custom_call.1} parent=1 // pred_check
      _
    $region39: #{tpu_custom_call.1} parent=1 // pred_check_branch
      %121 = sbr.rel (0) target = $region41
    $region40: #{tpu_custom_call.1} parent=1 // pred_region
      %122 = dma.done [#allocation4], 128
    $region41: #{tpu_custom_call.1} parent=1 // pred_fallthru
      _
    // Predicated region
    $region42: #{tpu_custom_call.1} parent=1 // pred_check
      _
    $region43: #{tpu_custom_call.1} parent=1 // pred_check_branch
      %124 = sbr.rel (0) target = $region45
    $region44: #{tpu_custom_call.1} parent=1 // pred_region
      %125 = dma.done [#allocation7], 16
    $region45: #{tpu_custom_call.1} parent=1 // pred_fallthru
      _
    // Predicated region
    $region46: #{tpu_custom_call.1} parent=1 // pred_check
      _
    $region47: #{tpu_custom_call.1} parent=1 // pred_check_branch
      %127 = sbr.rel (0) target = $region49
    $region48: #{tpu_custom_call.1} parent=1 // pred_region
      %128 = dma.done [#allocation7], 16
    $region49: #{tpu_custom_call.1} parent=1 // pred_fallthru
      _
    %129 = vsyncpa [#allocation3], 1
    %130 = vsyncpa [#allocation4], 1
    %131 = vsyncpa [#allocation7], 1

</llo_original>
